<compile_context>
chip_gen: v7x
topology: tpu7x:2x2x1
jax: 0.10.0
libtpu: 0.0.40
codegen_flags: <defaults>
</compile_context>

<pallas_src>
import jax
import jax.numpy as jnp
from jax.experimental import pallas as pl
from jax.experimental.pallas import tpu as pltpu


# ----------------------------- Pallas kernel --------------------------------

def _meca_kernel(x_ref, w1_ref, w2_ref, o_ref):
    """Fused MECA for one batch element (NCHW-native).

    x_ref : (1, C, HW)  input, spatial on the lane axis
    w1_ref: (Cmid, C)   first 1x1 conv weight  (== torch mlp[0].weight[:,:,0,0])
    w2_ref: (C, Cmid)   second 1x1 conv weight (== torch mlp[2].weight[:,:,0,0])
    o_ref : (1, C, HW)  x * sigmoid(mlp(avg_pool(x)) + mlp(max_pool(x)))
    """
    x = x_ref[0].astype(jnp.float32)                       # (C, HW)
    hw = x.shape[1]                                        # static

    # AdaptiveAvgPool2d(1) / AdaptiveMaxPool2d(1) == full-spatial reductions.
    avg = jnp.sum(x, axis=1, keepdims=True) * (1.0 / hw)   # (C, 1)
    mx = jnp.max(x, axis=1, keepdims=True)                 # (C, 1)
    pooled = jnp.concatenate([avg, mx], axis=1)            # (C, 2)

    # Shared MLP applied to both pooled vectors at once.
    w1 = w1_ref[...].astype(jnp.float32)                   # (Cmid, C)
    w2 = w2_ref[...].astype(jnp.float32)                   # (C, Cmid)
    h = jnp.dot(w1, pooled, preferred_element_type=jnp.float32)   # (Cmid, 2)
    h = h * jax.nn.sigmoid(h)                                      # SiLU, f32
    y = jnp.dot(w2, h, preferred_element_type=jnp.float32)         # (C, 2)

    attn = jax.nn.sigmoid(y[:, 0:1] + y[:, 1:2])            # (C, 1)

    # Broadcast channel attention over the spatial (lane) axis.
    o_ref[0] = (x * attn).astype(o_ref.dtype)


# ------------------------------ Wrapper --------------------------------------

def meca_forward(x_nchw, w1, w2):
    """MECA forward.

    x_nchw: (N, C, H, W)  (PyTorch layout)
    w1    : (Cmid, C)  == torch mlp[0].weight[:, :, 0, 0]
    w2    : (C, Cmid)  == torch mlp[2].weight[:, :, 0, 0]
    returns (N, C, H, W)
    """
    N, C, H, W = x_nchw.shape
    Cmid = w1.shape[0]
    assert w1.shape == (Cmid, C) and w2.shape == (C, Cmid)

    HW = H * W
    x = x_nchw.reshape(N, C, HW)                 # free reshape, stays NCHW-contiguous

    out = pl.pallas_call(
        _meca_kernel,
        out_shape=jax.ShapeDtypeStruct((N, C, HW), x_nchw.dtype),
        grid=(N,),
        in_specs=[
            pl.BlockSpec((1, C, HW), lambda n: (n, 0, 0)),
            pl.BlockSpec((Cmid, C), lambda n: (0, 0)),
            pl.BlockSpec((C, Cmid), lambda n: (0, 0)),
        ],
        out_specs=pl.BlockSpec((1, C, HW), lambda n: (n, 0, 0)),
        compiler_params=pltpu.CompilerParams(
            dimension_semantics=("parallel",)),
    )(x, w1, w2)

    return out.reshape(N, C, H, W)


# --------------------------------- main --------------------------------------

if __name__ == "__main__":
    key = jax.random.PRNGKey(0)
    kx, k1, k2 = jax.random.split(key, 3)

    # Small shapes consistent with the module: reduction_ratio=16 needs
    # in_channels >= 16; C=128 keeps the layout dense, H*W=256 is lane-dense.
    N, C, H, W = 2, 128, 16, 16
    reduction_ratio = 16
    Cmid = C // reduction_ratio

    x = jax.random.normal(kx, (N, C, H, W), jnp.float32)
    # Torch-layout weights: mlp[0].weight -> (Cmid, C), mlp[2].weight -> (C, Cmid)
    w1 = jax.random.normal(k1, (Cmid, C), jnp.float32) / jnp.sqrt(float(C))
    w2 = jax.random.normal(k2, (C, Cmid), jnp.float32) / jnp.sqrt(float(Cmid))

    out = meca_forward(x, w1, w2)
    out = jax.block_until_ready(out)

    # Plain-JAX reference mirroring the PyTorch forward.
    avg = jnp.mean(x, axis=(2, 3))                 # (N, C)
    mx = jnp.max(x, axis=(2, 3))                   # (N, C)

    def _mlp(v):
        h = v @ w1.T
        h = h * jax.nn.sigmoid(h)
        return h @ w2.T

    attn = jax.nn.sigmoid(_mlp(avg) + _mlp(mx))[:, :, None, None]
    ref = x * attn

    assert out.shape == (N, C, H, W), out.shape
    assert bool(jnp.all(jnp.isfinite(out)))
    err = float(jnp.max(jnp.abs(out - ref)))
    assert err < 1e-4, f"mismatch vs reference: {err}"

    print("KERNEL_OK")
</pallas_src>

<mosaic_0001>
module attributes {stable_mosaic.version = 11 : i64} {
  func.func @_meca_kernel(%arg0: i32, %arg1: memref<1x128x256xf32, #tpu.memory_space<vmem>>, %arg2: memref<8x128xf32, #tpu.memory_space<vmem>>, %arg3: memref<128x8xf32, #tpu.memory_space<vmem>>, %arg4: memref<1x128x256xf32, #tpu.memory_space<vmem>>) attributes {dimension_semantics = [#tpu.dimension_semantics<parallel>], iteration_bounds = array<i64: 2>, scalar_prefetch = 0 : i64, scratch_operands = 0 : i64, tpu.core_type = #tpu.core_type<tc>, window_params = [{transform_indices = @transform_0, window_bounds = array<i64: 1, 128, 256>}, {pipeline_mode = #tpu.pipeline_mode<synchronous>, transform_indices = @transform_1, window_bounds = array<i64: 8, 128>}, {pipeline_mode = #tpu.pipeline_mode<synchronous>, transform_indices = @transform_2, window_bounds = array<i64: 128, 8>}, {transform_indices = @transform_3, window_bounds = array<i64: 1, 128, 256>}]} {
    %c0 = arith.constant 0 : index
    %c0_0 = arith.constant 0 : index
    %c0_1 = arith.constant 0 : index
    %0 = vector.load %arg1[%c0, %c0_0, %c0_1] : memref<1x128x256xf32, #tpu.memory_space<vmem>>, vector<1x128x256xf32>
    %1 = vector.shape_cast %0 : vector<1x128x256xf32> to vector<128x256xf32>
    %cst = arith.constant dense<0.000000e+00> : vector<128xf32>
    %2 = vector.multi_reduction <add>, %1, %cst [1] : vector<128x256xf32> to vector<128xf32>
    %3 = vector.shape_cast %2 : vector<128xf32> to vector<128x1xf32>
    %cst_2 = arith.constant 3.906250e-03 : f32
    %4 = vector.broadcast %cst_2 : f32 to vector<128x1xf32>
    %5 = arith.mulf %3, %4 : vector<128x1xf32>
    %cst_3 = arith.constant dense<0xFF800000> : vector<128xf32>
    %6 = vector.multi_reduction <maximumf>, %1, %cst_3 [1] : vector<128x256xf32> to vector<128xf32>
    %7 = vector.shape_cast %6 : vector<128xf32> to vector<128x1xf32>
    %8 = tpu.concatenate %5, %7 in 1 : vector<128x1xf32>, vector<128x1xf32> -> vector<128x2xf32>
    %c0_4 = arith.constant 0 : index
    %c0_5 = arith.constant 0 : index
    %9 = vector.load %arg2[%c0_4, %c0_5] : memref<8x128xf32, #tpu.memory_space<vmem>>, vector<8x128xf32>
    %c0_6 = arith.constant 0 : index
    %c0_7 = arith.constant 0 : index
    %10 = vector.load %arg3[%c0_6, %c0_7] : memref<128x8xf32, #tpu.memory_space<vmem>>, vector<128x8xf32>
    %cst_8 = arith.constant dense<0.000000e+00> : vector<8x2xf32>
    %11 = tpu.matmul %9, %8, %cst_8 {dimension_numbers = #tpu.dot_dimension_numbers<[1], [0], [0], [1], [0, 0, 1, 1], [], []>} : vector<8x128xf32>, vector<128x2xf32>, vector<8x2xf32> -> vector<8x2xf32>
    %12 = arith.negf %11 : vector<8x2xf32>
    %13 = math.exp %12 : vector<8x2xf32>
    %cst_9 = arith.constant 1.000000e+00 : f32
    %14 = vector.broadcast %cst_9 : f32 to vector<8x2xf32>
    %15 = arith.addf %14, %13 : vector<8x2xf32>
    %16 = arith.divf %14, %15 : vector<8x2xf32>
    %17 = arith.mulf %11, %16 : vector<8x2xf32>
    %cst_10 = arith.constant dense<0.000000e+00> : vector<128x2xf32>
    %18 = tpu.matmul %10, %17, %cst_10 {dimension_numbers = #tpu.dot_dimension_numbers<[1], [0], [0], [1], [0, 0, 1, 1], [], []>} : vector<128x8xf32>, vector<8x2xf32>, vector<128x2xf32> -> vector<128x2xf32>
    %19 = vector.extract_strided_slice %18 {offsets = [0, 0], sizes = [128, 1], strides = [1, 1]} : vector<128x2xf32> to vector<128x1xf32>
    %20 = vector.extract_strided_slice %18 {offsets = [0, 1], sizes = [128, 1], strides = [1, 1]} : vector<128x2xf32> to vector<128x1xf32>
    %21 = arith.addf %19, %20 : vector<128x1xf32>
    %22 = arith.negf %21 : vector<128x1xf32>
    %23 = math.exp %22 : vector<128x1xf32>
    %cst_11 = arith.constant 1.000000e+00 : f32
    %24 = vector.broadcast %cst_11 : f32 to vector<128x1xf32>
    %25 = arith.addf %24, %23 : vector<128x1xf32>
    %26 = arith.divf %24, %25 : vector<128x1xf32>
    %27 = vector.broadcast %26 : vector<128x1xf32> to vector<128x256xf32>
    %28 = arith.mulf %1, %27 : vector<128x256xf32>
    %c0_12 = arith.constant 0 : index
    %c0_13 = arith.constant 0 : index
    %c0_14 = arith.constant 0 : index
    %29 = vector.load %arg4[%c0_12, %c0_13, %c0_14] : memref<1x128x256xf32, #tpu.memory_space<vmem>>, vector<1x128x256xf32>
    %30 = vector.shape_cast %29 : vector<1x128x256xf32> to vector<128x256xf32>
    %31 = vector.shape_cast %28 : vector<128x256xf32> to vector<1x128x256xf32>
    tpu.vector_store %arg4[%c0_12, %c0_13, %c0_14], %31 {strides = array<i32>} : memref<1x128x256xf32, #tpu.memory_space<vmem>>, vector<1x128x256xf32>,
    return
  }
  func.func @transform_0(%arg0: i32) -> (i32, i32, i32) {
    %c0_i32 = arith.constant 0 : i32
    %c0_i32_0 = arith.constant 0 : i32
    %c0_i32_1 = arith.constant 0 : i32
    return %arg0, %c0_i32, %c0_i32_0 : i32, i32, i32
  }
  func.func @transform_1(%arg0: i32) -> (i32, i32) {
    %c0_i32 = arith.constant 0 : i32
    %c0_i32_0 = arith.constant 0 : i32
    %c0_i32_1 = arith.constant 0 : i32
    return %c0_i32, %c0_i32_0 : i32, i32
  }
  func.func @transform_2(%arg0: i32) -> (i32, i32) {
    %c0_i32 = arith.constant 0 : i32
    %c0_i32_0 = arith.constant 0 : i32
    %c0_i32_1 = arith.constant 0 : i32
    return %c0_i32, %c0_i32_0 : i32, i32
  }
  func.func @transform_3(%arg0: i32) -> (i32, i32, i32) {
    %c0_i32 = arith.constant 0 : i32
    %c0_i32_0 = arith.constant 0 : i32
    %c0_i32_1 = arith.constant 0 : i32
    return %arg0, %c0_i32, %c0_i32_0 : i32, i32, i32
  }
}

</mosaic_0001>

<llo_original>
// kernel: tpu_custom_call.1
$region0: #{tpu_custom_call.1}
  #allocation0 [shape = 'u32[]', space=smem, size = 0x4, offset = 0x4, fixed_abs, tag = 'smem constant byte address 0x4 - core index']
  #allocation1 [shape = 'u32[144,128]{1,0:T(1,128)}', space=vmem, size = 0x12000, scoped, tag = 'internal scratch']
  %s0 = inlined_call_operand.hbm [shape: f32[2,128,256], index: 0, kind: input, shape index: {}]
  %s1 = inlined_call_operand.vmem [shape: f32[8,128], index: 1, kind: input, shape index: {}]
  %s2 = inlined_call_operand.vmem [shape: f32[128,8], index: 2, kind: input, shape index: {}]
  %s3 = inlined_call_operand.hbm [shape: f32[2,128,256], index: 3, kind: output, shape index: {}]
  %s4 = sld [smem:[#allocation0]]
  $region49: #{tpu_custom_call.1} parent=0
    _
  %s6 = ssub.s32 1, %s4
  %s7 = scalar_select 0, %s6, %s4
  $region1: #{tpu_custom_call.1} parent=0
    #allocation2 [shape = 'u8[262144]{0}', space=vmem, size = 0x40000, scoped, tag = 'input window, operand 0']
    #allocation3 [shape = 's32[2]{0}', space=sflag, size = 0x8, scoped, tag = 'scoped memory for tpu_custom_call.1']
    #allocation4 [shape = 's32[2]{0}', space=sflag, size = 0x8, scoped, tag = 'scoped memory for tpu_custom_call.1']
    #allocation5 [shape = 'u8[262144]{0}', space=vmem, size = 0x40000, scoped, tag = 'output window, operand 0']
    %8 = vsyncpa [#allocation3], 0
    %s9 = scalar_lea.sflag [#allocation3], 1
    %10 = vsyncpa %s9, 0
    %11 = vsyncpa [#allocation4], 0
    %s12 = scalar_lea.sflag [#allocation4], 1
    %13 = vsyncpa %s12, 0
    loop: start=0, step=1, limit=4
    $region2: #{tpu_custom_call.1} parent=1 // loop_pre_header
      _
    $region3: #{tpu_custom_call.1} parent=1 // loop_header
      %s15 = sphi 0, %s19
      %p16 = scmp.ge.s32.totalorder %s15, 4
      %s25 = sphi 0, %s27
      %s28 = sphi 0, %s25
      %s29 = sphi 0, %s28
      %s45 = sphi 0, %s29
      %s49 = sphi 0, %s49
      %s51 = sphi 0, %s49
      %s52 = sphi 0, %s51
      %s66 = sphi 0, %s52
      %s70 = sphi 0, %s70
      %s72 = sphi 0, %s70
      %s73 = sphi 0, %s72
      %s87 = sphi 0, %s73
      %s93 = sphi 0, %s95
      %s96 = sphi 0, %s93
      %s97 = sphi 0, %s96
      %s113 = sphi 0, %s97
    $region4: #{tpu_custom_call.1} parent=1 // loop_header_branch
      %18 = sbr.rel (%p16) target = $region8
    $region5: #{tpu_custom_call.1} parent=1 // loop_body
      %s20 = ssub.s32 %s15, 1
      %s21 = ssub.s32 %s15, 2
      %s22 = sadd.s32 %s15, 1
      %s23 = ssub.s32 %s15, %s22
      %p24 = scmp.eq.s32.totalorder %s23, 0
      %s26 = sadd.s32 %s25, 1
      %s27 = scalar_select %p24, %s25, %s26
      %p30 = pneg %p24
      %p31 = scmp.eq.s32.totalorder %s15, 1
      %p32 = por %p30, %p31
      %p33 = scmp.ne.s32.totalorder %s25, %s28
      %p34 = scmp.eq.s32.totalorder %s15, 0
      %p35 = por %p33, %p34
      %p36 = scmp.ne.s32.totalorder %s25, %s28
      %p37 = scmp.eq.s32.totalorder %s20, 1
      %p38 = por %p36, %p37
      %p39 = scmp.ne.s32.totalorder %s28, %s29
      %p40 = scmp.eq.s32.totalorder %s20, 0
      %p41 = por %p39, %p40
      %p42 = scmp.ne.s32.totalorder %s28, %s29
      %p43 = scmp.eq.s32.totalorder %s21, 1
      %p44 = por %p42, %p43
      %p46 = scmp.ne.s32.totalorder %s29, %s45
      %p47 = scmp.eq.s32.totalorder %s21, 0
      %p48 = por %p46, %p47
      %s50 = sadd.s32 %s49, 1
      %p53 = scmp.eq.s32.totalorder %s15, 1
      %p54 = scmp.ne.s32.totalorder %s49, %s51
      %p55 = scmp.eq.s32.totalorder %s15, 0
      %p56 = por %p54, %p55
      %p57 = scmp.ne.s32.totalorder %s49, %s51
      %p58 = scmp.eq.s32.totalorder %s20, 1
      %p59 = por %p57, %p58
      %p60 = scmp.ne.s32.totalorder %s51, %s52
      %p61 = scmp.eq.s32.totalorder %s20, 0
      %p62 = por %p60, %p61
      %p63 = scmp.ne.s32.totalorder %s51, %s52
      %p64 = scmp.eq.s32.totalorder %s21, 1
      %p65 = por %p63, %p64
      %p67 = scmp.ne.s32.totalorder %s52, %s66
      %p68 = scmp.eq.s32.totalorder %s21, 0
      %p69 = por %p67, %p68
      %s71 = sadd.s32 %s70, 1
      %p74 = scmp.eq.s32.totalorder %s15, 1
      %p75 = scmp.ne.s32.totalorder %s70, %s72
      %p76 = scmp.eq.s32.totalorder %s15, 0
      %p77 = por %p75, %p76
      %p78 = scmp.ne.s32.totalorder %s70, %s72
      %p79 = scmp.eq.s32.totalorder %s20, 1
      %p80 = por %p78, %p79
      %p81 = scmp.ne.s32.totalorder %s72, %s73
      %p82 = scmp.eq.s32.totalorder %s20, 0
      %p83 = por %p81, %p82
      %p84 = scmp.ne.s32.totalorder %s72, %s73
      %p85 = scmp.eq.s32.totalorder %s21, 1
      %p86 = por %p84, %p85
      %p88 = scmp.ne.s32.totalorder %s73, %s87
      %p89 = scmp.eq.s32.totalorder %s21, 0
      %p90 = por %p88, %p89
      %s91 = ssub.s32 %s15, %s22
      %p92 = scmp.eq.s32.totalorder %s91, 0
      %s94 = sadd.s32 %s93, 1
      %s95 = scalar_select %p92, %s93, %s94
      %p98 = pneg %p92
      %p99 = scmp.eq.s32.totalorder %s15, 1
      %p100 = por %p98, %p99
      %p101 = scmp.ne.s32.totalorder %s93, %s96
      %p102 = scmp.eq.s32.totalorder %s15, 0
      %p103 = por %p101, %p102
      %p104 = scmp.ne.s32.totalorder %s93, %s96
      %p105 = scmp.eq.s32.totalorder %s20, 1
      %p106 = por %p104, %p105
      %p107 = scmp.ne.s32.totalorder %s96, %s97
      %p108 = scmp.eq.s32.totalorder %s20, 0
      %p109 = por %p107, %p108
      %p110 = scmp.ne.s32.totalorder %s96, %s97
      %p111 = scmp.eq.s32.totalorder %s21, 1
      %p112 = por %p110, %p111
      %p114 = scmp.ne.s32.totalorder %s97, %s113
      %p115 = scmp.eq.s32.totalorder %s21, 0
      %p116 = por %p114, %p115
      %p117 = scmp.le.s32.totalorder 1, %s15
      %p118 = scmp.lt.s32.totalorder %s15, 3
      %p119 = pnand %p117, %p118
      %p120 = pneg %p119
      // Predicated region
      $region9: #{tpu_custom_call.1} parent=5 // pred_check
        _
      $region10: #{tpu_custom_call.1} parent=5 // pred_check_branch
        %122 = sbr.rel (%p119) target = $region12
      $region11: #{tpu_custom_call.1} parent=5 // pred_region
        %s123 = ssub.s32 %s15, 1
        // Predicated region
        $region13: #{tpu_custom_call.1} parent=11 // pred_check
          %p124 = pneg %p62
        $region14: #{tpu_custom_call.1} parent=11 // pred_check_branch
          %126 = sbr.rel (%p124) target = $region16
        $region15: #{tpu_custom_call.1} parent=11 // pred_region
          _
        $region16: #{tpu_custom_call.1} parent=11 // pred_fallthru
          _
        // Predicated region
        $region17: #{tpu_custom_call.1} parent=11 // pred_check
          %p127 = pneg %p83
        $region18: #{tpu_custom_call.1} parent=11 // pred_check_branch
          %129 = sbr.rel (%p127) target = $region20
        $region19: #{tpu_custom_call.1} parent=11 // pred_region
          _
        $region20: #{tpu_custom_call.1} parent=11 // pred_fallthru
          _
      $region12: #{tpu_custom_call.1} parent=5 // pred_fallthru
        _
      %p130 = scmp.lt.s32.totalorder %s15, 2
      // Predicated region
      $region21: #{tpu_custom_call.1} parent=5 // pred_check
        %p131 = pneg %p130
      $region22: #{tpu_custom_call.1} parent=5 // pred_check_branch
        %133 = sbr.rel (%p131) target = $region24
      $region23: #{tpu_custom_call.1} parent=5 // pred_region
        // Predicated region
        $region25: #{tpu_custom_call.1} parent=23 // pred_check
          %p134 = pneg %p35
        $region26: #{tpu_custom_call.1} parent=23 // pred_check_branch
          %136 = sbr.rel (%p134) target = $region28
        $region27: #{tpu_custom_call.1} parent=23 // pred_region
          %s137 = sand.u32 %s25, 1
          %s138 = scalar_lea.sflag [#allocation3], %s137
          %s139 = sand.u32 %s25, 1
          %s140 = smul.addr %s139, 256
          %s141 = scalar_lea.vmem [#allocation2], %s140
          %s143 = ssub.s32 4096, 4096
          %144 = vsyncadd %s138, %s143
          %s145 = smul.addr %s15, 32
          %s146 = smul.addr %s145, 128
          %s147 = scalar_lea.hbm %s0, %s146
          %s148 = sshll.u32 %s141, 4
          %s149 = int_to_ptr.vmem [resolvable:$true] %s148
          %154 = dma.hbm_to_vmem [thread:$0]  %s147, 4096, %s149, %s138, 256, 256, 16
        $region28: #{tpu_custom_call.1} parent=23 // pred_fallthru
          _
      $region24: #{tpu_custom_call.1} parent=5 // pred_fallthru
        _
      %p155 = scmp.le.s32.totalorder 1, %s15
      %p156 = scmp.lt.s32.totalorder %s15, 3
      %p157 = pnand %p155, %p156
      %p158 = pneg %p157
      // Predicated region
      $region29: #{tpu_custom_call.1} parent=5 // pred_check
        _
      $region30: #{tpu_custom_call.1} parent=5 // pred_check_branch
        %160 = sbr.rel (%p157) target = $region32
      $region31: #{tpu_custom_call.1} parent=5 // pred_region
        %s161 = ssub.s32 %s15, 1
        %s162 = sand.u32 %s28, 1
        %s163 = scalar_lea.sflag [#allocation3], %s162
        %s164 = sand.u32 %s28, 1
        %s165 = smul.addr %s164, 256
        %s166 = scalar_lea.vmem [#allocation2], %s165
        // Predicated region
        $region33: #{tpu_custom_call.1} parent=31 // pred_check
          %p167 = pneg %p41
        $region34: #{tpu_custom_call.1} parent=31 // pred_check_branch
          %169 = sbr.rel (%p167) target = $region36
        $region35: #{tpu_custom_call.1} parent=31 // pred_region
          %170 = dma.done %s163, 4096
        $region36: #{tpu_custom_call.1} parent=31 // pred_fallthru
          _
        %s171 = sand.u32 %s28, 1
        %s172 = scalar_lea.sflag [#allocation3], %s171
        %s173 = sand.u32 %s28, 1
        %s174 = smul.addr %s173, 256
        %s175 = scalar_lea.vmem [#allocation2], %s174
        %p176 = pneg %p41
        %p177 = pneg %p38
        %p178 = pneg %p62
        %p179 = pneg %p59
        %p180 = pneg %p83
        %p181 = pneg %p80
        %p182 = pneg %p109
        %p183 = pneg %p106
        %s184 = sand.u32 %s96, 1
        %s185 = scalar_lea.sflag [#allocation4], %s184
        %s186 = sand.u32 %s96, 1
        %s187 = smul.addr %s186, 256
        %s188 = scalar_lea.vmem [#allocation5], %s187
        %v189 = vld [vmem:[%s166] sm:$0xff]
        %v190 = vld [vmem:[%s166 + $0x8] sm:$0xff]
        %v191 = vld [vmem:[%s166 + $0x10] sm:$0xff]
        %v192 = vld [vmem:[%s166 + $0x18] sm:$0xff]
        %v193 = vld [vmem:[%s166 + $0x20] sm:$0xff]
        %v194 = vld [vmem:[%s166 + $0x28] sm:$0xff]
        %v195 = vld [vmem:[%s166 + $0x30] sm:$0xff]
        %v196 = vld [vmem:[%s166 + $0x38] sm:$0xff]
        %v197 = vld [vmem:[%s166 + $0x40] sm:$0xff]
        %v198 = vld [vmem:[%s166 + $0x48] sm:$0xff]
        %v199 = vld [vmem:[%s166 + $0x50] sm:$0xff]
        %v200 = vld [vmem:[%s166 + $0x58] sm:$0xff]
        %v201 = vld [vmem:[%s166 + $0x60] sm:$0xff]
        %v202 = vld [vmem:[%s166 + $0x68] sm:$0xff]
        %v203 = vld [vmem:[%s166 + $0x70] sm:$0xff]
        %v204 = vld [vmem:[%s166 + $0x78] sm:$0xff]
        %v205 = vld [vmem:[%s166 + $0x80] sm:$0xff]
        %v206 = vld [vmem:[%s166 + $0x88] sm:$0xff]
        %v207 = vld [vmem:[%s166 + $0x90] sm:$0xff]
        %v208 = vld [vmem:[%s166 + $0x98] sm:$0xff]
        %v209 = vld [vmem:[%s166 + $0xa0] sm:$0xff]
        %v210 = vld [vmem:[%s166 + $0xa8] sm:$0xff]
        %v211 = vld [vmem:[%s166 + $0xb0] sm:$0xff]
        %v212 = vld [vmem:[%s166 + $0xb8] sm:$0xff]
        %v213 = vld [vmem:[%s166 + $0xc0] sm:$0xff]
        %v214 = vld [vmem:[%s166 + $0xc8] sm:$0xff]
        %v215 = vld [vmem:[%s166 + $0xd0] sm:$0xff]
        %v216 = vld [vmem:[%s166 + $0xd8] sm:$0xff]
        %v217 = vld [vmem:[%s166 + $0xe0] sm:$0xff]
        %v218 = vld [vmem:[%s166 + $0xe8] sm:$0xff]
        %v219 = vld [vmem:[%s166 + $0xf0] sm:$0xff]
        %v220 = vld [vmem:[%s166 + $0xf8] sm:$0xff]
        %v221 = vadd.f32 %v189, %v190
        %222 = vadd.xlane.f32.xlu0 %v221
        %v223 = vpop.xlane.xlu0 %222
        %v224 = vadd.f32 %v191, %v192
        %225 = vadd.xlane.f32.xlu0 %v224
        %v226 = vpop.xlane.xlu0 %225
        %v227 = vadd.f32 %v193, %v194
        %228 = vadd.xlane.f32.xlu0 %v227
        %v229 = vpop.xlane.xlu0 %228
        %v230 = vadd.f32 %v195, %v196
        %231 = vadd.xlane.f32.xlu0 %v230
        %v232 = vpop.xlane.xlu0 %231
        %v233 = vadd.f32 %v197, %v198
        %234 = vadd.xlane.f32.xlu0 %v233
        %v235 = vpop.xlane.xlu0 %234
        %v236 = vadd.f32 %v199, %v200
        %237 = vadd.xlane.f32.xlu0 %v236
        %v238 = vpop.xlane.xlu0 %237
        %v239 = vadd.f32 %v201, %v202
        %240 = vadd.xlane.f32.xlu0 %v239
        %v241 = vpop.xlane.xlu0 %240
        %v242 = vadd.f32 %v203, %v204
        %243 = vadd.xlane.f32.xlu0 %v242
        %v244 = vpop.xlane.xlu0 %243
        %v245 = vadd.f32 %v205, %v206
        %246 = vadd.xlane.f32.xlu0 %v245
        %v247 = vpop.xlane.xlu0 %246
        %v248 = vadd.f32 %v207, %v208
        %249 = vadd.xlane.f32.xlu0 %v248
        %v250 = vpop.xlane.xlu0 %249
        %v251 = vadd.f32 %v209, %v210
        %252 = vadd.xlane.f32.xlu0 %v251
        %v253 = vpop.xlane.xlu0 %252
        %v254 = vadd.f32 %v211, %v212
        %255 = vadd.xlane.f32.xlu0 %v254
        %v256 = vpop.xlane.xlu0 %255
        %v257 = vadd.f32 %v213, %v214
        %258 = vadd.xlane.f32.xlu0 %v257
        %v259 = vpop.xlane.xlu0 %258
        %v260 = vadd.f32 %v215, %v216
        %261 = vadd.xlane.f32.xlu0 %v260
        %v262 = vpop.xlane.xlu0 %261
        %v263 = vadd.f32 %v217, %v218
        %264 = vadd.xlane.f32.xlu0 %v263
        %v265 = vpop.xlane.xlu0 %264
        %v266 = vadd.f32 %v219, %v220
        %267 = vadd.xlane.f32.xlu0 %v266
        %v268 = vpop.xlane.xlu0 %267
        %v269 = vmul.f32 %v223, 0.00390625
        %v270 = vmul.f32 %v226, 0.00390625
        %v271 = vmul.f32 %v229, 0.00390625
        %v272 = vmul.f32 %v232, 0.00390625
        %v273 = vmul.f32 %v235, 0.00390625
        %v274 = vmul.f32 %v238, 0.00390625
        %v275 = vmul.f32 %v241, 0.00390625
        %v276 = vmul.f32 %v244, 0.00390625
        %v277 = vmul.f32 %v247, 0.00390625
        %v278 = vmul.f32 %v250, 0.00390625
        %v279 = vmul.f32 %v253, 0.00390625
        %v280 = vmul.f32 %v256, 0.00390625
        %v281 = vmul.f32 %v259, 0.00390625
        %v282 = vmul.f32 %v262, 0.00390625
        %v283 = vmul.f32 %v265, 0.00390625
        %v284 = vmul.f32 %v268, 0.00390625
        %v285 = vmax.f32 %v189, %v190
        %286 = vmax.xlane.f32.xlu0 %v285
        %v287 = vpop.xlane.xlu0 %286
        %v288 = vmax.f32 %v191, %v192
        %289 = vmax.xlane.f32.xlu0 %v288
        %v290 = vpop.xlane.xlu0 %289
        %v291 = vmax.f32 %v193, %v194
        %292 = vmax.xlane.f32.xlu0 %v291
        %v293 = vpop.xlane.xlu0 %292
        %v294 = vmax.f32 %v195, %v196
        %295 = vmax.xlane.f32.xlu0 %v294
        %v296 = vpop.xlane.xlu0 %295
        %v297 = vmax.f32 %v197, %v198
        %298 = vmax.xlane.f32.xlu0 %v297
        %v299 = vpop.xlane.xlu0 %298
        %v300 = vmax.f32 %v199, %v200
        %301 = vmax.xlane.f32.xlu0 %v300
        %v302 = vpop.xlane.xlu0 %301
        %v303 = vmax.f32 %v201, %v202
        %304 = vmax.xlane.f32.xlu0 %v303
        %v305 = vpop.xlane.xlu0 %304
        %v306 = vmax.f32 %v203, %v204
        %307 = vmax.xlane.f32.xlu0 %v306
        %v308 = vpop.xlane.xlu0 %307
        %v309 = vmax.f32 %v205, %v206
        %310 = vmax.xlane.f32.xlu0 %v309
        %v311 = vpop.xlane.xlu0 %310
        %v312 = vmax.f32 %v207, %v208
        %313 = vmax.xlane.f32.xlu0 %v312
        %v314 = vpop.xlane.xlu0 %313
        %v315 = vmax.f32 %v209, %v210
        %316 = vmax.xlane.f32.xlu0 %v315
        %v317 = vpop.xlane.xlu0 %316
        %v318 = vmax.f32 %v211, %v212
        %319 = vmax.xlane.f32.xlu0 %v318
        %v320 = vpop.xlane.xlu0 %319
        %v321 = vmax.f32 %v213, %v214
        %322 = vmax.xlane.f32.xlu0 %v321
        %v323 = vpop.xlane.xlu0 %322
        %v324 = vmax.f32 %v215, %v216
        %325 = vmax.xlane.f32.xlu0 %v324
        %v326 = vpop.xlane.xlu0 %325
        %v327 = vmax.f32 %v217, %v218
        %328 = vmax.xlane.f32.xlu0 %v327
        %v329 = vpop.xlane.xlu0 %328
        %v330 = vmax.f32 %v219, %v220
        %331 = vmax.xlane.f32.xlu0 %v330
        %v332 = vpop.xlane.xlu0 %331
        %vm333 = vcmask 7168
        %v334 = vsel %vm333, %v269, %v287
        %v335 = vsel %vm333, %v270, %v290
        %v336 = vsel %vm333, %v271, %v293
        %v337 = vsel %vm333, %v272, %v296
        %v338 = vsel %vm333, %v273, %v299
        %v339 = vsel %vm333, %v274, %v302
        %v340 = vsel %vm333, %v275, %v305
        %v341 = vsel %vm333, %v276, %v308
        %v342 = vsel %vm333, %v277, %v311
        %v343 = vsel %vm333, %v278, %v314
        %v344 = vsel %vm333, %v279, %v317
        %v345 = vsel %vm333, %v280, %v320
        %v346 = vsel %vm333, %v281, %v323
        %v347 = vsel %vm333, %v282, %v326
        %v348 = vsel %vm333, %v283, %v329
        %v349 = vsel %vm333, %v284, %v332
        %v350 = vld [vmem:[%s1] sm:$0xff]
        %v351 = vld [vmem:[%s2] sm:$0xff]
        %v352 = vld [vmem:[%s2 + $0x8] sm:$0xff]
        %v353 = vld [vmem:[%s2 + $0x10] sm:$0xff]
        %v354 = vld [vmem:[%s2 + $0x18] sm:$0xff]
        %v355 = vld [vmem:[%s2 + $0x20] sm:$0xff]
        %v356 = vld [vmem:[%s2 + $0x28] sm:$0xff]
        %v357 = vld [vmem:[%s2 + $0x30] sm:$0xff]
        %v358 = vld [vmem:[%s2 + $0x38] sm:$0xff]
        %v359 = vld [vmem:[%s2 + $0x40] sm:$0xff]
        %v360 = vld [vmem:[%s2 + $0x48] sm:$0xff]
        %v361 = vld [vmem:[%s2 + $0x50] sm:$0xff]
        %v362 = vld [vmem:[%s2 + $0x58] sm:$0xff]
        %v363 = vld [vmem:[%s2 + $0x60] sm:$0xff]
        %v364 = vld [vmem:[%s2 + $0x68] sm:$0xff]
        %v365 = vld [vmem:[%s2 + $0x70] sm:$0xff]
        %v366 = vld [vmem:[%s2 + $0x78] sm:$0xff]
        %367 = vmatprep.subr.mxu0 0.0
        %368 = vmatpush1.msra.mxu0 %v334
        %369 = vmatprep.subr.mxu0 0.0
        %370 = vmatpush1.msra.mxu0 %v335
        %371 = vmatprep.subr.mxu0 0.0
        %372 = vmatpush1.msra.mxu0 %v336
        %373 = vmatprep.subr.mxu0 0.0
        %374 = vmatpush1.msra.mxu0 %v337
        %375 = vmatprep.subr.mxu0 0.0
        %376 = vmatpush1.msra.mxu0 %v338
        %377 = vmatprep.subr.mxu0 0.0
        %378 = vmatpush1.msra.mxu0 %v339
        %379 = vmatprep.subr.mxu0 0.0
        %380 = vmatpush1.msra.mxu0 %v340
        %381 = vmatprep.subr.mxu0 0.0
        %382 = vmatpush1.msra.mxu0 %v341
        %383 = vmatprep.subr.mxu0 0.0
        %384 = vmatpush1.msra.mxu0 %v342
        %385 = vmatprep.subr.mxu0 0.0
        %386 = vmatpush1.msra.mxu0 %v343
        %387 = vmatprep.subr.mxu0 0.0
        %388 = vmatpush1.msra.mxu0 %v344
        %389 = vmatprep.subr.mxu0 0.0
        %390 = vmatpush1.msra.mxu0 %v345
        %391 = vmatprep.subr.mxu0 0.0
        %392 = vmatpush1.msra.mxu0 %v346
        %393 = vmatprep.subr.mxu0 0.0
        %394 = vmatpush1.msra.mxu0 %v347
        %395 = vmatprep.subr.mxu0 0.0
        %396 = vmatpush1.msra.mxu0 %v348
        %397 = vmatprep.subr.mxu0 0.0
        %398 = vmatpush1.msra.mxu0 %v349
        %399 = vmatprep.subr.mxu0 0.0
        %400 = vmatpush1.msra.mxu0 0.0
        %401 = vmatprep.subr.mxu0 0.0
        %402 = vmatpush1.msra.mxu0 0.0
        %403 = vmatprep.subr.mxu0 0.0
        %404 = vmatpush1.msra.mxu0 0.0
        %405 = vmatprep.subr.mxu0 0.0
        %406 = vmatpush1.msra.mxu0 0.0
        %407 = vmatprep.subr.mxu0 0.0
        %408 = vmatpush1.msra.mxu0 0.0
        %409 = vmatprep.subr.mxu0 0.0
        %410 = vmatpush1.msra.mxu0 0.0
        %411 = vmatprep.subr.mxu0 0.0
        %412 = vmatpush1.msra.mxu0 0.0
        %413 = vmatprep.subr.mxu0 0.0
        %414 = vmatpush1.msra.mxu0 0.0
        %415 = vmatprep.subr.mxu0 0.0
        %416 = vmatpush1.msra.mxu0 0.0
        %417 = vmatprep.subr.mxu0 0.0
        %418 = vmatpush1.msra.mxu0 0.0
        %419 = vmatprep.subr.mxu0 0.0
        %420 = vmatpush1.msra.mxu0 0.0
        %421 = vmatprep.subr.mxu0 0.0
        %422 = vmatpush1.msra.mxu0 0.0
        %423 = vmatprep.subr.mxu0 0.0
        %424 = vmatpush1.msra.mxu0 0.0
        %425 = vmatprep.subr.mxu0 0.0
        %426 = vmatpush1.msra.mxu0 0.0
        %427 = vmatprep.subr.mxu0 0.0
        %428 = vmatpush1.msra.mxu0 0.0
        %429 = vmatprep.subr.mxu0 0.0
        %430 = vmatpush1.msra.mxu0 0.0
        %431 = vmatprep.mubr.f32.mxu0 0.0
        %432 = vmatmul.mubr.f32.gmra.mrb[0].mxu0 %v350
        %v433 = vpop.f32.mrb[0].mxu0
        %v434 = vadd.f32 0.0, %v433
        %v435 = vpop.f32.mrb[0].mxu0
        %436 = vdwg.mxu0
        %v437 = vxor.u32 %v434, 2147483648
        %v438 = vmul.f32 %v437, 1.442695
        %v439 = vpow.pop %v438
        %v440 = vadd.f32 %v439, 1.0
        %v441 = vrcp.pop %v440
        %v442 = vmul.f32 1.0, %v441
        %v443 = vmul.f32 %v434, %v442
        %vm444 = vcmask 64512
        %v446 = vsel %vm444, %v351, 0
        %v449 = vsel %vm444, %v352, 0
        %v452 = vsel %vm444, %v353, 0
        %v455 = vsel %vm444, %v354, 0
        %v458 = vsel %vm444, %v355, 0
        %v461 = vsel %vm444, %v356, 0
        %v464 = vsel %vm444, %v357, 0
        %v467 = vsel %vm444, %v358, 0
        %v470 = vsel %vm444, %v359, 0
        %v473 = vsel %vm444, %v360, 0
        %v476 = vsel %vm444, %v361, 0
        %v479 = vsel %vm444, %v362, 0
        %v482 = vsel %vm444, %v363, 0
        %v485 = vsel %vm444, %v364, 0
        %v488 = vsel %vm444, %v365, 0
        %v491 = vsel %vm444, %v366, 0
        %493 = vmatprep.subr.mxu0 0.0
        %494 = vmatpush1.msra.mxu0 %v443
        %495 = vmatprep.subr.mxu0 0.0
        %496 = vmatpush1.msra.mxu0 0.0
        %497 = vmatprep.subr.mxu0 0.0
        %498 = vmatpush1.msra.mxu0 0.0
        %499 = vmatprep.subr.mxu0 0.0
        %500 = vmatpush1.msra.mxu0 0.0
        %501 = vmatprep.subr.mxu0 0.0
        %502 = vmatpush1.msra.mxu0 0.0
        %503 = vmatprep.subr.mxu0 0.0
        %504 = vmatpush1.msra.mxu0 0.0
        %505 = vmatprep.subr.mxu0 0.0
        %506 = vmatpush1.msra.mxu0 0.0
        %507 = vmatprep.subr.mxu0 0.0
        %508 = vmatpush1.msra.mxu0 0.0
        %509 = vmatprep.subr.mxu0 0.0
        %510 = vmatpush1.msra.mxu0 0.0
        %511 = vmatprep.subr.mxu0 0.0
        %512 = vmatpush1.msra.mxu0 0.0
        %513 = vmatprep.subr.mxu0 0.0
        %514 = vmatpush1.msra.mxu0 0.0
        %515 = vmatprep.subr.mxu0 0.0
        %516 = vmatpush1.msra.mxu0 0.0
        %517 = vmatprep.subr.mxu0 0.0
        %518 = vmatpush1.msra.mxu0 0.0
        %519 = vmatprep.subr.mxu0 0.0
        %520 = vmatpush1.msra.mxu0 0.0
        %521 = vmatprep.subr.mxu0 0.0
        %522 = vmatpush1.msra.mxu0 0.0
        %523 = vmatprep.subr.mxu0 0.0
        %524 = vmatpush1.msra.mxu0 0.0
        %525 = vmatprep.subr.mxu0 0.0
        %526 = vmatpush1.msra.mxu0 0.0
        %527 = vmatprep.subr.mxu0 0.0
        %528 = vmatpush1.msra.mxu0 0.0
        %529 = vmatprep.subr.mxu0 0.0
        %530 = vmatpush1.msra.mxu0 0.0
        %531 = vmatprep.subr.mxu0 0.0
        %532 = vmatpush1.msra.mxu0 0.0
        %533 = vmatprep.subr.mxu0 0.0
        %534 = vmatpush1.msra.mxu0 0.0
        %535 = vmatprep.subr.mxu0 0.0
        %536 = vmatpush1.msra.mxu0 0.0
        %537 = vmatprep.subr.mxu0 0.0
        %538 = vmatpush1.msra.mxu0 0.0
        %539 = vmatprep.subr.mxu0 0.0
        %540 = vmatpush1.msra.mxu0 0.0
        %541 = vmatprep.subr.mxu0 0.0
        %542 = vmatpush1.msra.mxu0 0.0
        %543 = vmatprep.subr.mxu0 0.0
        %544 = vmatpush1.msra.mxu0 0.0
        %545 = vmatprep.subr.mxu0 0.0
        %546 = vmatpush1.msra.mxu0 0.0
        %547 = vmatprep.subr.mxu0 0.0
        %548 = vmatpush1.msra.mxu0 0.0
        %549 = vmatprep.subr.mxu0 0.0
        %550 = vmatpush1.msra.mxu0 0.0
        %551 = vmatprep.subr.mxu0 0.0
        %552 = vmatpush1.msra.mxu0 0.0
        %553 = vmatprep.subr.mxu0 0.0
        %554 = vmatpush1.msra.mxu0 0.0
        %555 = vmatprep.subr.mxu0 0.0
        %556 = vmatpush1.msra.mxu0 0.0
        %557 = vmatprep.mubr.f32.mxu0 0.0
        %558 = vmatmul.mubr.f32.gmra.mrb[0].mxu0 %v446
        %v559 = vpop.f32.mrb[0].mxu0
        %v560 = vadd.f32 0.0, %v559
        %v561 = vpop.f32.mrb[0].mxu0
        %562 = vmatprep.mubr.f32.mxu0 0.0
        %563 = vmatmul.mubr.f32.gmra.mrb[0].mxu0 %v449
        %v564 = vpop.f32.mrb[0].mxu0
        %v565 = vadd.f32 0.0, %v564
        %v566 = vpop.f32.mrb[0].mxu0
        %567 = vmatprep.mubr.f32.mxu0 0.0
        %568 = vmatmul.mubr.f32.gmra.mrb[0].mxu0 %v452
        %v569 = vpop.f32.mrb[0].mxu0
        %v570 = vadd.f32 0.0, %v569
        %v571 = vpop.f32.mrb[0].mxu0
        %572 = vmatprep.mubr.f32.mxu0 0.0
        %573 = vmatmul.mubr.f32.gmra.mrb[0].mxu0 %v455
        %v574 = vpop.f32.mrb[0].mxu0
        %v575 = vadd.f32 0.0, %v574
        %v576 = vpop.f32.mrb[0].mxu0
        %577 = vmatprep.mubr.f32.mxu0 0.0
        %578 = vmatmul.mubr.f32.gmra.mrb[0].mxu0 %v458
        %v579 = vpop.f32.mrb[0].mxu0
        %v580 = vadd.f32 0.0, %v579
        %v581 = vpop.f32.mrb[0].mxu0
        %582 = vmatprep.mubr.f32.mxu0 0.0
        %583 = vmatmul.mubr.f32.gmra.mrb[0].mxu0 %v461
        %v584 = vpop.f32.mrb[0].mxu0
        %v585 = vadd.f32 0.0, %v584
        %v586 = vpop.f32.mrb[0].mxu0
        %587 = vmatprep.mubr.f32.mxu0 0.0
        %588 = vmatmul.mubr.f32.gmra.mrb[0].mxu0 %v464
        %v589 = vpop.f32.mrb[0].mxu0
        %v590 = vadd.f32 0.0, %v589
        %v591 = vpop.f32.mrb[0].mxu0
        %592 = vmatprep.mubr.f32.mxu0 0.0
        %593 = vmatmul.mubr.f32.gmra.mrb[0].mxu0 %v467
        %v594 = vpop.f32.mrb[0].mxu0
        %v595 = vadd.f32 0.0, %v594
        %v596 = vpop.f32.mrb[0].mxu0
        %597 = vmatprep.mubr.f32.mxu0 0.0
        %598 = vmatmul.mubr.f32.gmra.mrb[0].mxu0 %v470
        %v599 = vpop.f32.mrb[0].mxu0
        %v600 = vadd.f32 0.0, %v599
        %v601 = vpop.f32.mrb[0].mxu0
        %602 = vmatprep.mubr.f32.mxu0 0.0
        %603 = vmatmul.mubr.f32.gmra.mrb[0].mxu0 %v473
        %v604 = vpop.f32.mrb[0].mxu0
        %v605 = vadd.f32 0.0, %v604
        %v606 = vpop.f32.mrb[0].mxu0
        %607 = vmatprep.mubr.f32.mxu0 0.0
        %608 = vmatmul.mubr.f32.gmra.mrb[0].mxu0 %v476
        %v609 = vpop.f32.mrb[0].mxu0
        %v610 = vadd.f32 0.0, %v609
        %v611 = vpop.f32.mrb[0].mxu0
        %612 = vmatprep.mubr.f32.mxu0 0.0
        %613 = vmatmul.mubr.f32.gmra.mrb[0].mxu0 %v479
        %v614 = vpop.f32.mrb[0].mxu0
        %v615 = vadd.f32 0.0, %v614
        %v616 = vpop.f32.mrb[0].mxu0
        %617 = vmatprep.mubr.f32.mxu0 0.0
        %618 = vmatmul.mubr.f32.gmra.mrb[0].mxu0 %v482
        %v619 = vpop.f32.mrb[0].mxu0
        %v620 = vadd.f32 0.0, %v619
        %v621 = vpop.f32.mrb[0].mxu0
        %622 = vmatprep.mubr.f32.mxu0 0.0
        %623 = vmatmul.mubr.f32.gmra.mrb[0].mxu0 %v485
        %v624 = vpop.f32.mrb[0].mxu0
        %v625 = vadd.f32 0.0, %v624
        %v626 = vpop.f32.mrb[0].mxu0
        %627 = vmatprep.mubr.f32.mxu0 0.0
        %628 = vmatmul.mubr.f32.gmra.mrb[0].mxu0 %v488
        %v629 = vpop.f32.mrb[0].mxu0
        %v630 = vadd.f32 0.0, %v629
        %v631 = vpop.f32.mrb[0].mxu0
        %632 = vmatprep.mubr.f32.mxu0 0.0
        %633 = vmatmul.mubr.f32.gmra.mrb[0].mxu0 %v491
        %v634 = vpop.f32.mrb[0].mxu0
        %v635 = vadd.f32 0.0, %v634
        %v636 = vpop.f32.mrb[0].mxu0
        %637 = vdwg.mxu0
        %654 = vrot.lane.b32.xlu0 %v560, 127
        %v655 = vpop.permute.xlu0 %654
        %656 = vrot.lane.b32.xlu0 %v565, 127
        %v657 = vpop.permute.xlu0 %656
        %658 = vrot.lane.b32.xlu0 %v570, 127
        %v659 = vpop.permute.xlu0 %658
        %660 = vrot.lane.b32.xlu0 %v575, 127
        %v661 = vpop.permute.xlu0 %660
        %662 = vrot.lane.b32.xlu0 %v580, 127
        %v663 = vpop.permute.xlu0 %662
        %664 = vrot.lane.b32.xlu0 %v585, 127
        %v665 = vpop.permute.xlu0 %664
        %666 = vrot.lane.b32.xlu0 %v590, 127
        %v667 = vpop.permute.xlu0 %666
        %668 = vrot.lane.b32.xlu0 %v595, 127
        %v669 = vpop.permute.xlu0 %668
        %670 = vrot.lane.b32.xlu0 %v600, 127
        %v671 = vpop.permute.xlu0 %670
        %672 = vrot.lane.b32.xlu0 %v605, 127
        %v673 = vpop.permute.xlu0 %672
        %674 = vrot.lane.b32.xlu0 %v610, 127
        %v675 = vpop.permute.xlu0 %674
        %676 = vrot.lane.b32.xlu0 %v615, 127
        %v677 = vpop.permute.xlu0 %676
        %678 = vrot.lane.b32.xlu0 %v620, 127
        %v679 = vpop.permute.xlu0 %678
        %680 = vrot.lane.b32.xlu0 %v625, 127
        %v681 = vpop.permute.xlu0 %680
        %682 = vrot.lane.b32.xlu0 %v630, 127
        %v683 = vpop.permute.xlu0 %682
        %684 = vrot.lane.b32.xlu0 %v635, 127
        %v685 = vpop.permute.xlu0 %684
        %v702 = vadd.f32 %v560, %v655
        %v703 = vadd.f32 %v565, %v657
        %v704 = vadd.f32 %v570, %v659
        %v705 = vadd.f32 %v575, %v661
        %v706 = vadd.f32 %v580, %v663
        %v707 = vadd.f32 %v585, %v665
        %v708 = vadd.f32 %v590, %v667
        %v709 = vadd.f32 %v595, %v669
        %v710 = vadd.f32 %v600, %v671
        %v711 = vadd.f32 %v605, %v673
        %v712 = vadd.f32 %v610, %v675
        %v713 = vadd.f32 %v615, %v677
        %v714 = vadd.f32 %v620, %v679
        %v715 = vadd.f32 %v625, %v681
        %v716 = vadd.f32 %v630, %v683
        %v717 = vadd.f32 %v635, %v685
        %v718 = vxor.u32 %v702, 2147483648
        %v719 = vxor.u32 %v703, 2147483648
        %v720 = vxor.u32 %v704, 2147483648
        %v721 = vxor.u32 %v705, 2147483648
        %v722 = vxor.u32 %v706, 2147483648
        %v723 = vxor.u32 %v707, 2147483648
        %v724 = vxor.u32 %v708, 2147483648
        %v725 = vxor.u32 %v709, 2147483648
        %v726 = vxor.u32 %v710, 2147483648
        %v727 = vxor.u32 %v711, 2147483648
        %v728 = vxor.u32 %v712, 2147483648
        %v729 = vxor.u32 %v713, 2147483648
        %v730 = vxor.u32 %v714, 2147483648
        %v731 = vxor.u32 %v715, 2147483648
        %v732 = vxor.u32 %v716, 2147483648
        %v733 = vxor.u32 %v717, 2147483648
        %v734 = vmul.f32 %v718, 1.442695
        %v735 = vpow.pop %v734
        %v736 = vmul.f32 %v719, 1.442695
        %v737 = vpow.pop %v736
        %v738 = vmul.f32 %v720, 1.442695
        %v739 = vpow.pop %v738
        %v740 = vmul.f32 %v721, 1.442695
        %v741 = vpow.pop %v740
        %v742 = vmul.f32 %v722, 1.442695
        %v743 = vpow.pop %v742
        %v744 = vmul.f32 %v723, 1.442695
        %v745 = vpow.pop %v744
        %v746 = vmul.f32 %v724, 1.442695
        %v747 = vpow.pop %v746
        %v748 = vmul.f32 %v725, 1.442695
        %v749 = vpow.pop %v748
        %v750 = vmul.f32 %v726, 1.442695
        %v751 = vpow.pop %v750
        %v752 = vmul.f32 %v727, 1.442695
        %v753 = vpow.pop %v752
        %v754 = vmul.f32 %v728, 1.442695
        %v755 = vpow.pop %v754
        %v756 = vmul.f32 %v729, 1.442695
        %v757 = vpow.pop %v756
        %v758 = vmul.f32 %v730, 1.442695
        %v759 = vpow.pop %v758
        %v760 = vmul.f32 %v731, 1.442695
        %v761 = vpow.pop %v760
        %v762 = vmul.f32 %v732, 1.442695
        %v763 = vpow.pop %v762
        %v764 = vmul.f32 %v733, 1.442695
        %v765 = vpow.pop %v764
        %v766 = vadd.f32 %v735, 1.0
        %v767 = vadd.f32 %v737, 1.0
        %v768 = vadd.f32 %v739, 1.0
        %v769 = vadd.f32 %v741, 1.0
        %v770 = vadd.f32 %v743, 1.0
        %v771 = vadd.f32 %v745, 1.0
        %v772 = vadd.f32 %v747, 1.0
        %v773 = vadd.f32 %v749, 1.0
        %v774 = vadd.f32 %v751, 1.0
        %v775 = vadd.f32 %v753, 1.0
        %v776 = vadd.f32 %v755, 1.0
        %v777 = vadd.f32 %v757, 1.0
        %v778 = vadd.f32 %v759, 1.0
        %v779 = vadd.f32 %v761, 1.0
        %v780 = vadd.f32 %v763, 1.0
        %v781 = vadd.f32 %v765, 1.0
        %v782 = vrcp.pop %v766
        %v783 = vmul.f32 1.0, %v782
        %v784 = vrcp.pop %v767
        %v785 = vmul.f32 1.0, %v784
        %v786 = vrcp.pop %v768
        %v787 = vmul.f32 1.0, %v786
        %v788 = vrcp.pop %v769
        %v789 = vmul.f32 1.0, %v788
        %v790 = vrcp.pop %v770
        %v791 = vmul.f32 1.0, %v790
        %v792 = vrcp.pop %v771
        %v793 = vmul.f32 1.0, %v792
        %v794 = vrcp.pop %v772
        %v795 = vmul.f32 1.0, %v794
        %v796 = vrcp.pop %v773
        %v797 = vmul.f32 1.0, %v796
        %v798 = vrcp.pop %v774
        %v799 = vmul.f32 1.0, %v798
        %v800 = vrcp.pop %v775
        %v801 = vmul.f32 1.0, %v800
        %v802 = vrcp.pop %v776
        %v803 = vmul.f32 1.0, %v802
        %v804 = vrcp.pop %v777
        %v805 = vmul.f32 1.0, %v804
        %v806 = vrcp.pop %v778
        %v807 = vmul.f32 1.0, %v806
        %v808 = vrcp.pop %v779
        %v809 = vmul.f32 1.0, %v808
        %v810 = vrcp.pop %v780
        %v811 = vmul.f32 1.0, %v810
        %v812 = vrcp.pop %v781
        %v813 = vmul.f32 1.0, %v812
        %815 = vset.pattern.permute.xlu0 0
        %816 = vperm.xlu0 %815, %v783
        %v817 = vpop.permute.xlu0 %816
        %820 = vset.pattern.permute.xlu0 0
        %821 = vperm.xlu0 %820, %v785
        %v822 = vpop.permute.xlu0 %821
        %825 = vset.pattern.permute.xlu0 0
        %826 = vperm.xlu0 %825, %v787
        %v827 = vpop.permute.xlu0 %826
        %830 = vset.pattern.permute.xlu0 0
        %831 = vperm.xlu0 %830, %v789
        %v832 = vpop.permute.xlu0 %831
        %835 = vset.pattern.permute.xlu0 0
        %836 = vperm.xlu0 %835, %v791
        %v837 = vpop.permute.xlu0 %836
        %840 = vset.pattern.permute.xlu0 0
        %841 = vperm.xlu0 %840, %v793
        %v842 = vpop.permute.xlu0 %841
        %845 = vset.pattern.permute.xlu0 0
        %846 = vperm.xlu0 %845, %v795
        %v847 = vpop.permute.xlu0 %846
        %850 = vset.pattern.permute.xlu0 0
        %851 = vperm.xlu0 %850, %v797
        %v852 = vpop.permute.xlu0 %851
        %855 = vset.pattern.permute.xlu0 0
        %856 = vperm.xlu0 %855, %v799
        %v857 = vpop.permute.xlu0 %856
        %860 = vset.pattern.permute.xlu0 0
        %861 = vperm.xlu0 %860, %v801
        %v862 = vpop.permute.xlu0 %861
        %865 = vset.pattern.permute.xlu0 0
        %866 = vperm.xlu0 %865, %v803
        %v867 = vpop.permute.xlu0 %866
        %870 = vset.pattern.permute.xlu0 0
        %871 = vperm.xlu0 %870, %v805
        %v872 = vpop.permute.xlu0 %871
        %875 = vset.pattern.permute.xlu0 0
        %876 = vperm.xlu0 %875, %v807
        %v877 = vpop.permute.xlu0 %876
        %880 = vset.pattern.permute.xlu0 0
        %881 = vperm.xlu0 %880, %v809
        %v882 = vpop.permute.xlu0 %881
        %885 = vset.pattern.permute.xlu0 0
        %886 = vperm.xlu0 %885, %v811
        %v887 = vpop.permute.xlu0 %886
        %890 = vset.pattern.permute.xlu0 0
        %891 = vperm.xlu0 %890, %v813
        %v892 = vpop.permute.xlu0 %891
        %v894 = vmul.f32 %v189, %v817
        %v895 = vmul.f32 %v190, %v817
        %v896 = vmul.f32 %v191, %v822
        %v897 = vmul.f32 %v192, %v822
        %v898 = vmul.f32 %v193, %v827
        %v899 = vmul.f32 %v194, %v827
        %v900 = vmul.f32 %v195, %v832
        %v901 = vmul.f32 %v196, %v832
        %v902 = vmul.f32 %v197, %v837
        %v903 = vmul.f32 %v198, %v837
        %v904 = vmul.f32 %v199, %v842
        %v905 = vmul.f32 %v200, %v842
        %v906 = vmul.f32 %v201, %v847
        %v907 = vmul.f32 %v202, %v847
        %v908 = vmul.f32 %v203, %v852
        %v909 = vmul.f32 %v204, %v852
        %v910 = vmul.f32 %v205, %v857
        %v911 = vmul.f32 %v206, %v857
        %v912 = vmul.f32 %v207, %v862
        %v913 = vmul.f32 %v208, %v862
        %v914 = vmul.f32 %v209, %v867
        %v915 = vmul.f32 %v210, %v867
        %v916 = vmul.f32 %v211, %v872
        %v917 = vmul.f32 %v212, %v872
        %v918 = vmul.f32 %v213, %v877
        %v919 = vmul.f32 %v214, %v877
        %v920 = vmul.f32 %v215, %v882
        %v921 = vmul.f32 %v216, %v882
        %v922 = vmul.f32 %v217, %v887
        %v923 = vmul.f32 %v218, %v887
        %v924 = vmul.f32 %v219, %v892
        %v925 = vmul.f32 %v220, %v892
        %926 = vst [vmem:[%s188] sm:$0xff] %v894
        %927 = vst [vmem:[%s188 + $0x8] sm:$0xff] %v895
        %928 = vst [vmem:[%s188 + $0x10] sm:$0xff] %v896
        %929 = vst [vmem:[%s188 + $0x18] sm:$0xff] %v897
        %930 = vst [vmem:[%s188 + $0x20] sm:$0xff] %v898
        %931 = vst [vmem:[%s188 + $0x28] sm:$0xff] %v899
        %932 = vst [vmem:[%s188 + $0x30] sm:$0xff] %v900
        %933 = vst [vmem:[%s188 + $0x38] sm:$0xff] %v901
        %934 = vst [vmem:[%s188 + $0x40] sm:$0xff] %v902
        %935 = vst [vmem:[%s188 + $0x48] sm:$0xff] %v903
        %936 = vst [vmem:[%s188 + $0x50] sm:$0xff] %v904
        %937 = vst [vmem:[%s188 + $0x58] sm:$0xff] %v905
        %938 = vst [vmem:[%s188 + $0x60] sm:$0xff] %v906
        %939 = vst [vmem:[%s188 + $0x68] sm:$0xff] %v907
        %940 = vst [vmem:[%s188 + $0x70] sm:$0xff] %v908
        %941 = vst [vmem:[%s188 + $0x78] sm:$0xff] %v909
        %942 = vst [vmem:[%s188 + $0x80] sm:$0xff] %v910
        %943 = vst [vmem:[%s188 + $0x88] sm:$0xff] %v911
        %944 = vst [vmem:[%s188 + $0x90] sm:$0xff] %v912
        %945 = vst [vmem:[%s188 + $0x98] sm:$0xff] %v913
        %946 = vst [vmem:[%s188 + $0xa0] sm:$0xff] %v914
        %947 = vst [vmem:[%s188 + $0xa8] sm:$0xff] %v915
        %948 = vst [vmem:[%s188 + $0xb0] sm:$0xff] %v916
        %949 = vst [vmem:[%s188 + $0xb8] sm:$0xff] %v917
        %950 = vst [vmem:[%s188 + $0xc0] sm:$0xff] %v918
        %951 = vst [vmem:[%s188 + $0xc8] sm:$0xff] %v919
        %952 = vst [vmem:[%s188 + $0xd0] sm:$0xff] %v920
        %953 = vst [vmem:[%s188 + $0xd8] sm:$0xff] %v921
        %954 = vst [vmem:[%s188 + $0xe0] sm:$0xff] %v922
        %955 = vst [vmem:[%s188 + $0xe8] sm:$0xff] %v923
        %956 = vst [vmem:[%s188 + $0xf0] sm:$0xff] %v924
        %957 = vst [vmem:[%s188 + $0xf8] sm:$0xff] %v925
        %s958 = sand.u32 %s96, 1
        %s959 = scalar_lea.sflag [#allocation4], %s958
        %s960 = sand.u32 %s96, 1
        %s961 = smul.addr %s960, 256
        %s962 = scalar_lea.vmem [#allocation5], %s961
        // Predicated region
        $region37: #{tpu_custom_call.1} parent=31 // pred_check
          %p963 = pneg %p106
        $region38: #{tpu_custom_call.1} parent=31 // pred_check_branch
          %965 = sbr.rel (%p963) target = $region40
        $region39: #{tpu_custom_call.1} parent=31 // pred_region
          %s967 = ssub.s32 4096, 4096
          %968 = vsyncadd %s959, %s967
          %s969 = smul.addr %s20, 32
          %s970 = smul.addr %s969, 128
          %s971 = scalar_lea.hbm %s3, %s970
          %s972 = sshll.u32 %s962, 4
          %s973 = int_to_ptr.vmem [resolvable:$true] %s972
          %978 = dma.vmem_to_hbm [thread:$0]  %s973, 4096, %s971, %s959, 256, 256, 16
        $region40: #{tpu_custom_call.1} parent=31 // pred_fallthru
          _
      $region32: #{tpu_custom_call.1} parent=5 // pred_fallthru
        _
      %p979 = scmp.le.s32.totalorder 2, %s15
      // Predicated region
      $region41: #{tpu_custom_call.1} parent=5 // pred_check
        %p980 = pneg %p979
      $region42: #{tpu_custom_call.1} parent=5 // pred_check_branch
        %982 = sbr.rel (%p980) target = $region44
      $region43: #{tpu_custom_call.1} parent=5 // pred_region
        %s983 = ssub.s32 %s15, 2
        // Predicated region
        $region45: #{tpu_custom_call.1} parent=43 // pred_check
          %p984 = pneg %p112
        $region46: #{tpu_custom_call.1} parent=43 // pred_check_branch
          %986 = sbr.rel (%p984) target = $region48
        $region47: #{tpu_custom_call.1} parent=43 // pred_region
          %s987 = sand.u32 %s97, 1
          %s988 = scalar_lea.sflag [#allocation4], %s987
          %s989 = sand.u32 %s97, 1
          %s990 = smul.addr %s989, 256
          %s991 = scalar_lea.vmem [#allocation5], %s990
          %992 = dma.done %s988, 4096
        $region48: #{tpu_custom_call.1} parent=43 // pred_fallthru
          _
      $region44: #{tpu_custom_call.1} parent=5 // pred_fallthru
        _
    $region6: #{tpu_custom_call.1} parent=1 // loop_footer
      %s19 = sadd.s32 1, %s15
    $region7: #{tpu_custom_call.1} parent=1 // loop_footer_branch
      %14 = sbr.rel target = $region3
    $region8: #{tpu_custom_call.1} parent=1 // loop_exit
      _
    %993 = vsyncpa [#allocation3], 1
    %s994 = scalar_lea.sflag [#allocation3], 1
    %995 = vsyncpa %s994, 1
    %996 = vsyncpa [#allocation4], 1
    %s997 = scalar_lea.sflag [#allocation4], 1
    %998 = vsyncpa %s997, 1

</llo_original>
